<compile_context>
chip_gen: v6e
topology: v6e:2x2x1
jax: 0.10.0
libtpu: 0.0.40
codegen_flags: <defaults>
</compile_context>

<pallas_src>
import jax
import jax.numpy as jnp
import numpy as np
from jax.experimental import pallas as pl
from jax.experimental.pallas import tpu as pltpu

# Max node-tile (sublane axis).  Multiple of 8.  With 4 refs (2 in, 2 out),
# each lane-padded to 128 and double-buffered, footprint is tile_n * 4 KiB,
# i.e. 16 MiB at 4096 rows -- within the raised VMEM limit on all generations.
TILE_N_MAX = 4096
VMEM_LIMIT_BYTES = 32 * 1024 * 1024


def _cfd_node_kernel(y_ref, x_ref, fine_y_ref, nodes_ref):
    """Per-tile passthrough: slice channels + float32 cast + copy.

    process_sim == identity, so the only per-node work is the channel slice,
    the float32 cast (a no-op when inputs already arrive as f32) and the copy.
    """
    fine_y_ref[...] = y_ref[:, :3].astype(jnp.float32)   # sim output, 3 ch
    nodes_ref[...] = x_ref[:, :2].astype(jnp.float32)    # coarse node xy


def cfd_forward(coarse_y, coarse_x, aoa, mach_or_reynolds, coarse_batch):
    """JAX/Pallas equivalent of CFD.forward.

    Returns (fine_y, sim_info, params); fine_y is the module's return value
    and sim_info mirrors self.sim_info.
    """
    N, CY = coarse_y.shape
    CX = coarse_x.shape[1]

    # TODO(synk): write_mesh_file / torch.load(coarse_path) are host file IO
    # with no Pallas equivalent; coarse data is passed in directly.

    # params = torch.stack([aoa, mach_or_reynolds], dim=1) -- 16 bytes of
    # work, done in plain XLA (a Pallas kernel here is pure launch overhead).
    params = jnp.stack(
        [aoa.astype(jnp.float32), mach_or_reynolds.astype(jnp.float32)],
        axis=1)

    if N == 0:  # empty coarse graph: avoid a zero-size grid
        fine_y = jnp.zeros((0, 3), jnp.float32)
        sim_nodes = jnp.zeros((0, 2), jnp.float32)
        return fine_y, {"nodes": sim_nodes, "batch": coarse_batch,
                        "output": fine_y}, params

    # Node tile: full extent for small meshes (single grid step), otherwise a
    # large multiple-of-8 tile with a ragged (masked) final block.
    tile_n = N if N <= TILE_N_MAX else TILE_N_MAX
    grid_n = pl.cdiv(N, tile_n)

    fine_y, sim_nodes = pl.pallas_call(
        _cfd_node_kernel,
        out_shape=(
            jax.ShapeDtypeStruct((N, 3), jnp.float32),
            jax.ShapeDtypeStruct((N, 2), jnp.float32),
        ),
        grid_spec=pltpu.PrefetchScalarGridSpec(
            num_scalar_prefetch=0,
            grid=(grid_n,),
            in_specs=[
                pl.BlockSpec((tile_n, CY), lambda i: (i, 0)),
                pl.BlockSpec((tile_n, CX), lambda i: (i, 0)),
            ],
            out_specs=[
                pl.BlockSpec((tile_n, 3), lambda i: (i, 0)),
                pl.BlockSpec((tile_n, 2), lambda i: (i, 0)),
            ],
        ),
        compiler_params=pltpu.CompilerParams(
            dimension_semantics=("parallel",),
            vmem_limit_bytes=VMEM_LIMIT_BYTES),
    )(coarse_y, coarse_x)

    sim_info = {
        "nodes": sim_nodes,       # coarse_x.float()[:, :2]
        "batch": coarse_batch,    # passthrough metadata (no compute)
        "output": fine_y,         # coarse_y (processed, float32, 3 cols)
    }
    return fine_y, sim_info, params


if __name__ == "__main__":
    key = jax.random.PRNGKey(0)
    k1, k2, k3, k4 = jax.random.split(key, 4)

    B = 2                 # batch.aoa.shape[0]
    N_COARSE = 64         # total coarse graph nodes across the batch
    CY = 4                # raw sim-output channels (>= 3, gets sliced to 3)
    CX = 5                # coarse node features (x, y, aoa, mach, sdf-ish)

    coarse_y = jax.random.normal(k1, (N_COARSE, CY), dtype=jnp.float32)
    coarse_x = jax.random.normal(k2, (N_COARSE, CX), dtype=jnp.float32)
    aoa = jax.random.uniform(k3, (B,), dtype=jnp.float32) * 10.0
    mach = jax.random.uniform(k4, (B,), dtype=jnp.float32)
    coarse_batch = jnp.repeat(jnp.arange(B, dtype=jnp.int32), N_COARSE // B)

    cfd_forward_jit = jax.jit(cfd_forward)
    fine_y, sim_info, params = cfd_forward_jit(
        coarse_y, coarse_x, aoa, mach, coarse_batch)
    jax.block_until_ready((fine_y, sim_info["nodes"], params))

    # Reference semantics (plain JAX / what PyTorch computes).
    ref_fine_y = coarse_y.astype(jnp.float32)[:, :3]
    ref_nodes = coarse_x.astype(jnp.float32)[:, :2]
    ref_params = jnp.stack([aoa, mach], axis=1)

    np.testing.assert_allclose(np.asarray(fine_y), np.asarray(ref_fine_y),
                               rtol=0, atol=0)
    np.testing.assert_allclose(np.asarray(sim_info["nodes"]),
                               np.asarray(ref_nodes), rtol=0, atol=0)
    np.testing.assert_allclose(np.asarray(params), np.asarray(ref_params),
                               rtol=0, atol=0)
    assert fine_y.shape == (N_COARSE, 3) and fine_y.dtype == jnp.float32
    assert sim_info["nodes"].shape == (N_COARSE, 2)
    assert params.shape == (B, 2)

    print("KERNEL_OK")
</pallas_src>

<mosaic_0001>
module attributes {stable_mosaic.version = 11 : i64} {
  func.func @_cfd_node_kernel(%arg0: i32, %arg1: memref<64x4xf32, #tpu.memory_space<vmem>>, %arg2: memref<64x5xf32, #tpu.memory_space<vmem>>, %arg3: memref<64x3xf32, #tpu.memory_space<vmem>>, %arg4: memref<64x2xf32, #tpu.memory_space<vmem>>) attributes {dimension_semantics = [#tpu.dimension_semantics<parallel>], iteration_bounds = array<i64: 1>, scalar_prefetch = 0 : i64, scratch_operands = 0 : i64, tpu.core_type = #tpu.core_type<tc>, window_params = [{transform_indices = @transform_0, window_bounds = array<i64: 64, 4>}, {transform_indices = @transform_1, window_bounds = array<i64: 64, 5>}, {transform_indices = @transform_2, window_bounds = array<i64: 64, 3>}, {transform_indices = @transform_3, window_bounds = array<i64: 64, 2>}]} {
    %c0 = arith.constant 0 : index
    %c0_0 = arith.constant 0 : index
    %0 = vector.load %arg1[%c0, %c0_0] : memref<64x4xf32, #tpu.memory_space<vmem>>, vector<64x3xf32>
    %c0_1 = arith.constant 0 : index
    %c0_2 = arith.constant 0 : index
    %1 = vector.load %arg3[%c0_1, %c0_2] : memref<64x3xf32, #tpu.memory_space<vmem>>, vector<64x3xf32>
    tpu.vector_store %arg3[%c0_1, %c0_2], %0 {strides = array<i32>} : memref<64x3xf32, #tpu.memory_space<vmem>>, vector<64x3xf32>,
    %c0_3 = arith.constant 0 : index
    %c0_4 = arith.constant 0 : index
    %2 = vector.load %arg2[%c0_3, %c0_4] : memref<64x5xf32, #tpu.memory_space<vmem>>, vector<64x2xf32>
    %c0_5 = arith.constant 0 : index
    %c0_6 = arith.constant 0 : index
    %3 = vector.load %arg4[%c0_5, %c0_6] : memref<64x2xf32, #tpu.memory_space<vmem>>, vector<64x2xf32>
    tpu.vector_store %arg4[%c0_5, %c0_6], %2 {strides = array<i32>} : memref<64x2xf32, #tpu.memory_space<vmem>>, vector<64x2xf32>,
    return
  }
  func.func @transform_0(%arg0: i32) -> (i32, i32) {
    %c0_i32 = arith.constant 0 : i32
    %c0_i32_0 = arith.constant 0 : i32
    return %arg0, %c0_i32 : i32, i32
  }
  func.func @transform_1(%arg0: i32) -> (i32, i32) {
    %c0_i32 = arith.constant 0 : i32
    %c0_i32_0 = arith.constant 0 : i32
    return %arg0, %c0_i32 : i32, i32
  }
  func.func @transform_2(%arg0: i32) -> (i32, i32) {
    %c0_i32 = arith.constant 0 : i32
    %c0_i32_0 = arith.constant 0 : i32
    return %arg0, %c0_i32 : i32, i32
  }
  func.func @transform_3(%arg0: i32) -> (i32, i32) {
    %c0_i32 = arith.constant 0 : i32
    %c0_i32_0 = arith.constant 0 : i32
    return %arg0, %c0_i32 : i32, i32
  }
}

</mosaic_0001>

<llo_original>
// kernel: cfd_forward.1
$region0: #{cfd_forward.1}
  #allocation0 [shape = 'u32[]', space=smem, size = 0x4, offset = 0x4, fixed_abs, tag = 'smem constant byte address 0x4 - core index']
  #allocation1 [shape = 'u32[144,128]{1,0:T(1,128)}', space=vmem, size = 0x12000, scoped, tag = 'internal scratch']
  %s0 = inlined_call_operand.vmem [shape: f32[64,4], index: 0, kind: input, shape index: {}]
  %s1 = inlined_call_operand.vmem [shape: f32[64,5], index: 1, kind: input, shape index: {}]
  %s2 = inlined_call_operand.vmem [shape: f32[64,3], index: 2, kind: output, shape index: {0}]
  %s3 = inlined_call_operand.vmem [shape: f32[64,2], index: 3, kind: output, shape index: {1}]
  %4 = xla_tuple %s2, %s3
  %s5 = sld [smem:[#allocation0]]
  $region26: #{cfd_forward.1} parent=0
    _
  %s7 = ssub.s32 1, %s5
  %s8 = scalar_select 0, %s7, %s5
  // Predicated region
  $region2: #{cfd_forward.1} parent=0 // pred_check
    _
  $region3: #{cfd_forward.1} parent=0 // pred_check_branch
    %10 = sbr.rel (0) target = $region5
  $region4: #{cfd_forward.1} parent=0 // pred_region
    _
  $region5: #{cfd_forward.1} parent=0 // pred_fallthru
    _
  // Predicated region
  $region6: #{cfd_forward.1} parent=0 // pred_check
    _
  $region7: #{cfd_forward.1} parent=0 // pred_check_branch
    %12 = sbr.rel (0) target = $region9
  $region8: #{cfd_forward.1} parent=0 // pred_region
    _
  $region9: #{cfd_forward.1} parent=0 // pred_fallthru
    _
  %v13 = vld [vmem:[%s0] sm:$0xff]
  %v14 = vld [vmem:[%s0 + $0x8] sm:$0xff]
  %v15 = vld [vmem:[%s0 + $0x10] sm:$0xff]
  %v16 = vld [vmem:[%s0 + $0x18] sm:$0xff]
  %v17 = vld [vmem:[%s0 + $0x20] sm:$0xff]
  %v18 = vld [vmem:[%s0 + $0x28] sm:$0xff]
  %v19 = vld [vmem:[%s0 + $0x30] sm:$0xff]
  %v20 = vld [vmem:[%s0 + $0x38] sm:$0xff]
  %vm21 = vcmask 23552
  %22 = vst.msk [vmem:[%s2] sm:$0xff] %vm21, %v13
  %23 = vst.msk [vmem:[%s2 + $0x8] sm:$0xff] %vm21, %v14
  %24 = vst.msk [vmem:[%s2 + $0x10] sm:$0xff] %vm21, %v15
  %25 = vst.msk [vmem:[%s2 + $0x18] sm:$0xff] %vm21, %v16
  %26 = vst.msk [vmem:[%s2 + $0x20] sm:$0xff] %vm21, %v17
  %27 = vst.msk [vmem:[%s2 + $0x28] sm:$0xff] %vm21, %v18
  %28 = vst.msk [vmem:[%s2 + $0x30] sm:$0xff] %vm21, %v19
  %29 = vst.msk [vmem:[%s2 + $0x38] sm:$0xff] %vm21, %v20
  %v30 = vld [vmem:[%s1] sm:$0xff]
  %v31 = vld [vmem:[%s1 + $0x8] sm:$0xff]
  %v32 = vld [vmem:[%s1 + $0x10] sm:$0xff]
  %v33 = vld [vmem:[%s1 + $0x18] sm:$0xff]
  %v34 = vld [vmem:[%s1 + $0x20] sm:$0xff]
  %v35 = vld [vmem:[%s1 + $0x28] sm:$0xff]
  %v36 = vld [vmem:[%s1 + $0x30] sm:$0xff]
  %v37 = vld [vmem:[%s1 + $0x38] sm:$0xff]
  %vm38 = vcmask 15360
  %39 = vst.msk [vmem:[%s3] sm:$0xff] %vm38, %v30
  %40 = vst.msk [vmem:[%s3 + $0x8] sm:$0xff] %vm38, %v31
  %41 = vst.msk [vmem:[%s3 + $0x10] sm:$0xff] %vm38, %v32
  %42 = vst.msk [vmem:[%s3 + $0x18] sm:$0xff] %vm38, %v33
  %43 = vst.msk [vmem:[%s3 + $0x20] sm:$0xff] %vm38, %v34
  %44 = vst.msk [vmem:[%s3 + $0x28] sm:$0xff] %vm38, %v35
  %45 = vst.msk [vmem:[%s3 + $0x30] sm:$0xff] %vm38, %v36
  %46 = vst.msk [vmem:[%s3 + $0x38] sm:$0xff] %vm38, %v37
  // Predicated region
  $region10: #{cfd_forward.1} parent=0 // pred_check
    _
  $region11: #{cfd_forward.1} parent=0 // pred_check_branch
    %48 = sbr.rel (0) target = $region13
  $region12: #{cfd_forward.1} parent=0 // pred_region
    _
  $region13: #{cfd_forward.1} parent=0 // pred_fallthru
    _
  // Predicated region
  $region14: #{cfd_forward.1} parent=0 // pred_check
    _
  $region15: #{cfd_forward.1} parent=0 // pred_check_branch
    %50 = sbr.rel (0) target = $region17
  $region16: #{cfd_forward.1} parent=0 // pred_region
    _
  $region17: #{cfd_forward.1} parent=0 // pred_fallthru
    _
  // Predicated region
  $region18: #{cfd_forward.1} parent=0 // pred_check
    _
  $region19: #{cfd_forward.1} parent=0 // pred_check_branch
    %52 = sbr.rel (0) target = $region21
  $region20: #{cfd_forward.1} parent=0 // pred_region
    _
  $region21: #{cfd_forward.1} parent=0 // pred_fallthru
    _
  // Predicated region
  $region22: #{cfd_forward.1} parent=0 // pred_check
    _
  $region23: #{cfd_forward.1} parent=0 // pred_check_branch
    %54 = sbr.rel (0) target = $region25
  $region24: #{cfd_forward.1} parent=0 // pred_region
    _
  $region25: #{cfd_forward.1} parent=0 // pred_fallthru
    _

</llo_original>
